<compile_context>
chip_gen: v7x
topology: tpu7x:2x2x1
jax: 0.10.0
libtpu: 0.0.40
codegen_flags: <defaults>
</compile_context>

<pallas_src>
import functools

import jax
import jax.numpy as jnp
from jax import lax
from jax.experimental import pallas as pl
from jax.experimental.pallas import tpu as pltpu


_LANES = 128
_SUBLANES = 8
_ALIGN_ELEMS = 16 * _LANES     # rows kept a multiple of 16 (bf16 sublane pack)
_MAX_BLOCK_ROWS = 8192         # 8192 x 128: 4 MiB (f32) + 2 MiB (bf16) / block
_PAD_LOGIT = -40.0             # sigmoid(-40) ~ 4e-18, log1p(exp(-40)) ~ 4e-18


# ----------------------------------------------------------------------------
# Pallas kernel: fused elementwise + reduction.
# Accumulates per-vreg partial sums directly into the resident output block
# out_ref of shape (4, 8, 128):
#   [0] = BCE-with-logits(pred, gt_bin)
#   [1] = sigmoid(pred) * gt_bin            (Dice intersection)
#   [2] = sigmoid(pred)^2                   (Dice A_sum)
#   [3] = gt_bin                            (Dice B_sum; gt_bin^2 == gt_bin)
# gt thresholding (resized_gt > 0.5) happens inside the kernel.
# ----------------------------------------------------------------------------
def _loss_sums_kernel(pred_ref, gt_ref, out_ref, *, valid_rows, block_rows,
                      nblocks):
    i = pl.program_id(0)

    @pl.when(i == 0)
    def _():
        out_ref[...] = jnp.zeros_like(out_ref)

    x = pred_ref[...].astype(jnp.float32)
    g = gt_ref[...].astype(jnp.float32)

    # Ragged tail handling: only generated (static check) when the last grid
    # block overruns the array. Invalid rows are forced to neutral values
    # (pred = -40 logit, gt = 0) so they contribute ~0 to all four sums.
    if nblocks * block_rows > valid_rows:
        row0 = i * block_rows
        rid = row0 + lax.broadcasted_iota(jnp.int32, (block_rows, 1), 0)
        valid = rid < valid_rows               # (block_rows, 1) -> lane bcast
        x = jnp.where(valid, x, _PAD_LOGIT)
        g = jnp.where(valid, g, 0.0)

    m = g > 0.5                                # binarized gt, reused

    # Share exp(-|x|) between the BCE term and the sigmoid.
    e = jnp.exp(-jnp.abs(x))
    # sigmoid(x) = 1/(1+e) if x >= 0 else e/(1+e); approx rcp runs on the EUP.
    r = pl.reciprocal(1.0 + e, approx=True)
    s = jnp.where(x >= 0.0, r, e * r)
    # Stable BCE with logits, y in {0,1}:
    #   max(x,0) - x*y + log1p(exp(-|x|)) == relu(where(y, -x, x)) + log1p(e)
    bce = jnp.maximum(jnp.where(m, -x, x), 0.0) + jnp.log1p(e)

    def blk_sum(v):  # (block_rows, 128) -> (8, 128): pure VPU vreg adds
        return v.reshape(-1, _SUBLANES, _LANES).sum(axis=0)

    out_ref[0] += blk_sum(bce)
    out_ref[1] += blk_sum(jnp.where(m, s, 0.0))
    out_ref[2] += blk_sum(s * s)
    out_ref[3] += blk_sum(jnp.where(m, 1.0, 0.0))


def _loss_sums(pred2, gt2, *, valid_rows, block_rows, nblocks):
    """pred2/gt2: (rows, 128) 2-D views (pred native dtype, gt bf16)."""
    n = valid_rows * _LANES
    out_bytes = 4 * _SUBLANES * _LANES * 4

    kernel = functools.partial(_loss_sums_kernel,
                               valid_rows=valid_rows,
                               block_rows=block_rows,
                               nblocks=nblocks)

    in_spec = pl.BlockSpec((block_rows, _LANES), lambda i: (i, 0))
    out_spec = pl.BlockSpec((4, _SUBLANES, _LANES), lambda i: (0, 0, 0))

    partials = pl.pallas_call(
        kernel,
        out_shape=jax.ShapeDtypeStruct((4, _SUBLANES, _LANES), jnp.float32),
        grid_spec=pltpu.PrefetchScalarGridSpec(
            num_scalar_prefetch=0,
            grid=(nblocks,),
            in_specs=[in_spec, in_spec],
            out_specs=out_spec,
        ),
        compiler_params=pltpu.CompilerParams(
            dimension_semantics=("arbitrary",),
            vmem_limit_bytes=32 * 1024 * 1024),
        cost_estimate=pl.CostEstimate(
            flops=16 * n,
            transcendentals=3 * n,
            bytes_accessed=(pred2.size * pred2.dtype.itemsize
                            + gt2.size * gt2.dtype.itemsize + out_bytes)),
    )(pred2, gt2)

    # Tiny epilogue reduce (4, 8, 128) -> (4,) in plain JAX.
    return partials.sum(axis=(1, 2))


# ----------------------------------------------------------------------------
# MaskLoss forward (JAX glue + Pallas reduction kernel).
# ----------------------------------------------------------------------------
def mask_loss(pred, gt, *, bce_loss_weight, dice_loss_weight,
              heatmap_size, video_frames):
    """pred: (N, V, Hh, Hw) logits;  gt: (N, V, H, W) raw masks (NCHW, C=V*1).
    heatmap_size = [w, h] matching the PyTorch module convention."""
    N, V, Hin, Win = gt.shape
    assert V == video_frames
    hm_w, hm_h = heatmap_size[0], heatmap_size[1]
    assert pred.shape == (N, V, hm_h, hm_w)

    # rearrange 'N (V C) h w -> (N V) C h w', C=1  + bilinear resize
    # (antialias=False, half-pixel)  + rearrange back.  Glue, not hot path.
    gt_nv = gt.reshape(N * V, 1, Hin, Win).astype(jnp.float32)
    gt_rs = jax.image.resize(gt_nv, (N * V, 1, hm_h, hm_w),
                             method="bilinear", antialias=False)
    # Stream gt as bf16 (cast fuses into the resize fusion); the (>0.5)
    # threshold is applied inside the kernel.
    gt_f = gt_rs.astype(jnp.bfloat16).reshape(-1)
    pred_f = pred.reshape(-1)          # keep native dtype (f32 or bf16)

    count = N * V * hm_h * hm_w

    # Alignment fallback only: pad to a multiple of 16*128 so the flat stream
    # reshapes to (rows, 128) with rows % 16 == 0.  For typical heatmap sizes
    # (h*w a multiple of 2048 elements overall) this is a no-op, so there is
    # no extra HBM pass.  Pad values are neutral (pred=-40 logit, gt=0).
    # TODO(synk): handle unaligned counts fully in-kernel to drop this copy.
    padded = -(-count // _ALIGN_ELEMS) * _ALIGN_ELEMS
    if padded != count:
        pad = padded - count
        pred_f = jnp.pad(pred_f, (0, pad), constant_values=_PAD_LOGIT)
        gt_f = jnp.pad(gt_f, (0, pad), constant_values=0.0)

    rows = padded // _LANES            # multiple of 16
    block_rows = min(_MAX_BLOCK_ROWS, rows)
    nblocks = -(-rows // block_rows)

    sums = _loss_sums(pred_f.reshape(rows, _LANES),
                      gt_f.reshape(rows, _LANES),
                      valid_rows=rows, block_rows=block_rows, nblocks=nblocks)

    bce_sum, intersection, a_sum, b_sum = sums[0], sums[1], sums[2], sums[3]
    bce_loss = bce_sum / jnp.float32(count)            # reduction='mean'
    smooth = jnp.float32(1.0)
    dice_loss = 1.0 - (2.0 * intersection + smooth) / (a_sum + b_sum + smooth)

    total = bce_loss * bce_loss_weight + dice_loss * dice_loss_weight
    return total


if __name__ == "__main__":
    # Deterministic "module params" (MaskLoss.__init__ arguments).
    bce_loss_weight = 1.0
    dice_loss_weight = 0.5
    heatmap_size = [16, 16]   # [w, h]
    video_frames = 4

    # Small deterministic inputs.
    key = jax.random.PRNGKey(0)
    k1, k2 = jax.random.split(key)
    N = 2
    Hin = Win = 32            # gt input spatial size (resized down to 16x16)
    pred = jax.random.normal(k1, (N, video_frames, heatmap_size[1],
                                  heatmap_size[0]), dtype=jnp.float32)
    gt = jax.random.uniform(k2, (N, video_frames, Hin, Win),
                            dtype=jnp.float32)

    loss_fn = jax.jit(functools.partial(
        mask_loss,
        bce_loss_weight=bce_loss_weight,
        dice_loss_weight=dice_loss_weight,
        heatmap_size=heatmap_size,
        video_frames=video_frames))

    loss = loss_fn(pred, gt)
    jax.block_until_ready(loss)
    print("KERNEL_OK")
</pallas_src>

<mosaic_0001>
module attributes {stable_mosaic.version = 11 : i64} {
  func.func @_loss_sums_kernel(%arg0: i32, %arg1: memref<16x128xf32, #tpu.memory_space<vmem>>, %arg2: memref<16x128xbf16, #tpu.memory_space<vmem>>, %arg3: memref<4x8x128xf32, #tpu.memory_space<vmem>>) attributes {dimension_semantics = [#tpu.dimension_semantics<arbitrary>], iteration_bounds = array<i64: 1>, scalar_prefetch = 0 : i64, scratch_operands = 0 : i64, tpu.core_type = #tpu.core_type<tc>, window_params = [{transform_indices = @transform_0, window_bounds = array<i64: 16, 128>}, {transform_indices = @transform_1, window_bounds = array<i64: 16, 128>}, {pipeline_mode = #tpu.pipeline_mode<synchronous>, transform_indices = @transform_2, window_bounds = array<i64: 4, 8, 128>}]} {
    %c0_i32 = arith.constant 0 : i32
    %0 = arith.cmpi eq, %arg0, %c0_i32 : i32
    %1 = arith.extui %0 : i1 to i32
    %c0_i32_0 = arith.constant 0 : i32
    %2 = arith.cmpi ne, %1, %c0_i32_0 : i32
    scf.if %2 {
      %cst_37 = arith.constant 0.000000e+00 : f32
      %64 = vector.broadcast %cst_37 : f32 to vector<4x8x128xf32>
      %c0_38 = arith.constant 0 : index
      %c0_39 = arith.constant 0 : index
      %c0_40 = arith.constant 0 : index
      %65 = vector.load %arg3[%c0_38, %c0_39, %c0_40] : memref<4x8x128xf32, #tpu.memory_space<vmem>>, vector<4x8x128xf32>
      tpu.vector_store %arg3[%c0_38, %c0_39, %c0_40], %64 {strides = array<i32>} : memref<4x8x128xf32, #tpu.memory_space<vmem>>, vector<4x8x128xf32>,
    } else {
    }
    %c0 = arith.constant 0 : index
    %c0_1 = arith.constant 0 : index
    %3 = vector.load %arg1[%c0, %c0_1] : memref<16x128xf32, #tpu.memory_space<vmem>>, vector<16x128xf32>
    %c0_2 = arith.constant 0 : index
    %c0_3 = arith.constant 0 : index
    %4 = vector.load %arg2[%c0_2, %c0_3] : memref<16x128xbf16, #tpu.memory_space<vmem>>, vector<16x128xbf16>
    %5 = arith.extf %4 : vector<16x128xbf16> to vector<16x128xf32>
    %cst = arith.constant 5.000000e-01 : f32
    %6 = vector.broadcast %cst : f32 to vector<16x128xf32>
    %7 = arith.cmpf ogt, %5, %6 : vector<16x128xf32>
    %8 = math.absf %3 : vector<16x128xf32>
    %cst_4 = arith.constant 0.000000e+00 : f32
    %9 = vector.broadcast %cst_4 : f32 to vector<16x128xf32>
    %10 = arith.subf %9, %8 : vector<16x128xf32>
    %11 = math.exp %10 : vector<16x128xf32>
    %cst_5 = arith.constant 1.000000e+00 : f32
    %12 = vector.broadcast %cst_5 : f32 to vector<16x128xf32>
    %13 = arith.addf %12, %11 : vector<16x128xf32>
    %14 = tpu.reciprocal %13 {approx = true} : vector<16x128xf32> -> vector<16x128xf32>
    %cst_6 = arith.constant 0.000000e+00 : f32
    %15 = vector.broadcast %cst_6 : f32 to vector<16x128xf32>
    %16 = arith.cmpf oge, %3, %15 : vector<16x128xf32>
    %17 = arith.mulf %11, %14 : vector<16x128xf32>
    %18 = arith.select %16, %14, %17 : vector<16x128xi1>, vector<16x128xf32>
    %cst_7 = arith.constant 0.000000e+00 : f32
    %19 = vector.broadcast %cst_7 : f32 to vector<16x128xf32>
    %20 = arith.subf %19, %3 : vector<16x128xf32>
    %21 = arith.select %7, %20, %3 : vector<16x128xi1>, vector<16x128xf32>
    %cst_8 = arith.constant 0.000000e+00 : f32
    %22 = vector.broadcast %cst_8 : f32 to vector<16x128xf32>
    %23 = arith.maximumf %21, %22 : vector<16x128xf32>
    %24 = math.log1p %11 : vector<16x128xf32>
    %25 = arith.addf %23, %24 : vector<16x128xf32>
    %c0_9 = arith.constant 0 : index
    %c0_10 = arith.constant 0 : index
    %c0_11 = arith.constant 0 : index
    %26 = vector.load %arg3[%c0_9, %c0_10, %c0_11] : memref<4x8x128xf32, #tpu.memory_space<vmem>>, vector<1x8x128xf32>
    %27 = vector.shape_cast %26 : vector<1x8x128xf32> to vector<8x128xf32>
    %28 = vector.shape_cast %25 : vector<16x128xf32> to vector<2x8x128xf32>
    %cst_12 = arith.constant dense<0.000000e+00> : vector<8x128xf32>
    %29 = vector.multi_reduction <add>, %28, %cst_12 [0] : vector<2x8x128xf32> to vector<8x128xf32>
    %30 = arith.addf %27, %29 : vector<8x128xf32>
    %c0_13 = arith.constant 0 : index
    %c0_14 = arith.constant 0 : index
    %c0_15 = arith.constant 0 : index
    %31 = vector.load %arg3[%c0_13, %c0_14, %c0_15] : memref<4x8x128xf32, #tpu.memory_space<vmem>>, vector<1x8x128xf32>
    %32 = vector.shape_cast %31 : vector<1x8x128xf32> to vector<8x128xf32>
    %33 = vector.shape_cast %30 : vector<8x128xf32> to vector<1x8x128xf32>
    tpu.vector_store %arg3[%c0_13, %c0_14, %c0_15], %33 {strides = array<i32>} : memref<4x8x128xf32, #tpu.memory_space<vmem>>, vector<1x8x128xf32>,
    %c1 = arith.constant 1 : index
    %c0_16 = arith.constant 0 : index
    %c0_17 = arith.constant 0 : index
    %34 = vector.load %arg3[%c1, %c0_16, %c0_17] : memref<4x8x128xf32, #tpu.memory_space<vmem>>, vector<1x8x128xf32>
    %35 = vector.shape_cast %34 : vector<1x8x128xf32> to vector<8x128xf32>
    %cst_18 = arith.constant 0.000000e+00 : f32
    %36 = vector.broadcast %cst_18 : f32 to vector<16x128xf32>
    %37 = arith.select %7, %18, %36 : vector<16x128xi1>, vector<16x128xf32>
    %38 = vector.shape_cast %37 : vector<16x128xf32> to vector<2x8x128xf32>
    %cst_19 = arith.constant dense<0.000000e+00> : vector<8x128xf32>
    %39 = vector.multi_reduction <add>, %38, %cst_19 [0] : vector<2x8x128xf32> to vector<8x128xf32>
    %40 = arith.addf %35, %39 : vector<8x128xf32>
    %c1_20 = arith.constant 1 : index
    %c0_21 = arith.constant 0 : index
    %c0_22 = arith.constant 0 : index
    %41 = vector.load %arg3[%c1_20, %c0_21, %c0_22] : memref<4x8x128xf32, #tpu.memory_space<vmem>>, vector<1x8x128xf32>
    %42 = vector.shape_cast %41 : vector<1x8x128xf32> to vector<8x128xf32>
    %43 = vector.shape_cast %40 : vector<8x128xf32> to vector<1x8x128xf32>
    tpu.vector_store %arg3[%c1_20, %c0_21, %c0_22], %43 {strides = array<i32>} : memref<4x8x128xf32, #tpu.memory_space<vmem>>, vector<1x8x128xf32>,
    %c2 = arith.constant 2 : index
    %c0_23 = arith.constant 0 : index
    %c0_24 = arith.constant 0 : index
    %44 = vector.load %arg3[%c2, %c0_23, %c0_24] : memref<4x8x128xf32, #tpu.memory_space<vmem>>, vector<1x8x128xf32>
    %45 = vector.shape_cast %44 : vector<1x8x128xf32> to vector<8x128xf32>
    %46 = arith.mulf %18, %18 : vector<16x128xf32>
    %47 = vector.shape_cast %46 : vector<16x128xf32> to vector<2x8x128xf32>
    %cst_25 = arith.constant dense<0.000000e+00> : vector<8x128xf32>
    %48 = vector.multi_reduction <add>, %47, %cst_25 [0] : vector<2x8x128xf32> to vector<8x128xf32>
    %49 = arith.addf %45, %48 : vector<8x128xf32>
    %c2_26 = arith.constant 2 : index
    %c0_27 = arith.constant 0 : index
    %c0_28 = arith.constant 0 : index
    %50 = vector.load %arg3[%c2_26, %c0_27, %c0_28] : memref<4x8x128xf32, #tpu.memory_space<vmem>>, vector<1x8x128xf32>
    %51 = vector.shape_cast %50 : vector<1x8x128xf32> to vector<8x128xf32>
    %52 = vector.shape_cast %49 : vector<8x128xf32> to vector<1x8x128xf32>
    tpu.vector_store %arg3[%c2_26, %c0_27, %c0_28], %52 {strides = array<i32>} : memref<4x8x128xf32, #tpu.memory_space<vmem>>, vector<1x8x128xf32>,
    %c3 = arith.constant 3 : index
    %c0_29 = arith.constant 0 : index
    %c0_30 = arith.constant 0 : index
    %53 = vector.load %arg3[%c3, %c0_29, %c0_30] : memref<4x8x128xf32, #tpu.memory_space<vmem>>, vector<1x8x128xf32>
    %54 = vector.shape_cast %53 : vector<1x8x128xf32> to vector<8x128xf32>
    %cst_31 = arith.constant 1.000000e+00 : f32
    %cst_32 = arith.constant 0.000000e+00 : f32
    %55 = vector.broadcast %cst_31 : f32 to vector<16x128xf32>
    %56 = vector.broadcast %cst_32 : f32 to vector<16x128xf32>
    %57 = arith.select %7, %55, %56 : vector<16x128xi1>, vector<16x128xf32>
    %58 = vector.shape_cast %57 : vector<16x128xf32> to vector<2x8x128xf32>
    %cst_33 = arith.constant dense<0.000000e+00> : vector<8x128xf32>
    %59 = vector.multi_reduction <add>, %58, %cst_33 [0] : vector<2x8x128xf32> to vector<8x128xf32>
    %60 = arith.addf %54, %59 : vector<8x128xf32>
    %c3_34 = arith.constant 3 : index
    %c0_35 = arith.constant 0 : index
    %c0_36 = arith.constant 0 : index
    %61 = vector.load %arg3[%c3_34, %c0_35, %c0_36] : memref<4x8x128xf32, #tpu.memory_space<vmem>>, vector<1x8x128xf32>
    %62 = vector.shape_cast %61 : vector<1x8x128xf32> to vector<8x128xf32>
    %63 = vector.shape_cast %60 : vector<8x128xf32> to vector<1x8x128xf32>
    tpu.vector_store %arg3[%c3_34, %c0_35, %c0_36], %63 {strides = array<i32>} : memref<4x8x128xf32, #tpu.memory_space<vmem>>, vector<1x8x128xf32>,
    return
  }
  func.func @transform_0(%arg0: i32) -> (i32, i32) {
    %c0_i32 = arith.constant 0 : i32
    %c0_i32_0 = arith.constant 0 : i32
    return %arg0, %c0_i32 : i32, i32
  }
  func.func @transform_1(%arg0: i32) -> (i32, i32) {
    %c0_i32 = arith.constant 0 : i32
    %c0_i32_0 = arith.constant 0 : i32
    return %arg0, %c0_i32 : i32, i32
  }
  func.func @transform_2(%arg0: i32) -> (i32, i32, i32) {
    %c0_i32 = arith.constant 0 : i32
    %c0_i32_0 = arith.constant 0 : i32
    %c0_i32_1 = arith.constant 0 : i32
    %c0_i32_2 = arith.constant 0 : i32
    return %c0_i32, %c0_i32_0, %c0_i32_1 : i32, i32, i32
  }
}

</mosaic_0001>

<llo_original>
// kernel: mask_loss.1
$region0: #{mask_loss.1}
  #allocation0 [shape = 'u32[]', space=smem, size = 0x4, offset = 0x4, fixed_abs, tag = 'smem constant byte address 0x4 - core index']
  #allocation1 [shape = 'u32[144,128]{1,0:T(1,128)}', space=vmem, size = 0x12000, scoped, tag = 'internal scratch']
  %s0 = inlined_call_operand.vmem [shape: f32[16,128], index: 0, kind: input, shape index: {}]
  %s1 = inlined_call_operand.vmem [shape: bf16[16,128], index: 1, kind: input, shape index: {}]
  %s2 = inlined_call_operand.vmem [shape: f32[4,8,128], index: 2, kind: output, shape index: {}]
  %s3 = sld [smem:[#allocation0]]
  $region22: #{mask_loss.1} parent=0
    _
  %s5 = ssub.s32 1, %s3
  %s6 = scalar_select 0, %s5, %s3
  // Predicated region
  $region2: #{mask_loss.1} parent=0 // pred_check
    _
  $region3: #{mask_loss.1} parent=0 // pred_check_branch
    %8 = sbr.rel (0) target = $region5
  $region4: #{mask_loss.1} parent=0 // pred_region
    _
  $region5: #{mask_loss.1} parent=0 // pred_fallthru
    _
  // Predicated region
  $region6: #{mask_loss.1} parent=0 // pred_check
    _
  $region7: #{mask_loss.1} parent=0 // pred_check_branch
    %10 = sbr.rel (0) target = $region9
  $region8: #{mask_loss.1} parent=0 // pred_region
    _
  $region9: #{mask_loss.1} parent=0 // pred_fallthru
    _
  %p11 = scmp.eq.s32.totalorder 0, 0
  // Predicated region
  $region10: #{mask_loss.1} parent=0 // pred_check
    %p12 = pneg %p11
  $region11: #{mask_loss.1} parent=0 // pred_check_branch
    %14 = sbr.rel (%p12) target = $region13
  $region12: #{mask_loss.1} parent=0 // pred_region
    %15 = vst [vmem:[%s2] sm:$0xff] 0.0
    %16 = vst [vmem:[%s2 + $0x8] sm:$0xff] 0.0
    %17 = vst [vmem:[%s2 + $0x10] sm:$0xff] 0.0
    %18 = vst [vmem:[%s2 + $0x18] sm:$0xff] 0.0
  $region13: #{mask_loss.1} parent=0 // pred_fallthru
    _
  %v19 = vld [vmem:[%s0] sm:$0xff]
  %v20 = vld [vmem:[%s0 + $0x8] sm:$0xff]
  %v21 = vld [vmem:[%s1] sm:$0xf]
  %v22 = vld [vmem:[%s1 + $0x4] sm:$0xf]
  %v23 = vunpack.c.l.bf16 %v21
  %v24 = vunpack.c.l.bf16 %v22
  %vm25 = vcmp.gt.f32.partialorder %v23, 0.5
  %vm26 = vcmp.gt.f32.partialorder %v24, 0.5
  %v27 = vand.u32 2147483647, %v19
  %v28 = vand.u32 2147483647, %v20
  %v29 = vsub.f32 0.0, %v27
  %v30 = vsub.f32 0.0, %v28
  %v31 = vmul.f32 %v29, 1.442695
  %v32 = vpow.pop %v31
  %v33 = vmul.f32 %v30, 1.442695
  %v34 = vpow.pop %v33
  %v35 = vadd.f32 %v32, 1.0
  %v36 = vadd.f32 %v34, 1.0
  %v37 = vrcp.pop %v35
  %v38 = vrcp.pop %v36
  %vm39 = vcmp.ge.f32.partialorder %v19, 0.0
  %vm40 = vcmp.ge.f32.partialorder %v20, 0.0
  %v41 = vmul.f32 %v32, %v37
  %v42 = vmul.f32 %v34, %v38
  %v43 = vsel %vm39, %v37, %v41
  %v44 = vsel %vm40, %v38, %v42
  %v45 = vsub.f32 0.0, %v19
  %v46 = vsub.f32 0.0, %v20
  %v47 = vsel %vm25, %v45, %v19
  %v48 = vsel %vm26, %v46, %v20
  %v49 = vmax.f32 %v47, 0.0
  %v50 = vmax.f32 %v48, 0.0
  %v51 = vadd.f32 %v32, 1.0
  %v52 = vlog2.pop %v51
  %v53 = vmul.f32 %v52, 0.6931472
  %v54 = vmul.f32 -0.5, %v32
  %v55 = vadd.f32 %v54, 1.0
  %v56 = vmul.f32 %v55, %v32
  %v57 = vand.u32 2147483647, %v32
  %vm58 = vcmp.lt.f32.partialorder %v57, 0.0004427343
  %v59 = vsel %vm58, %v56, %v53
  %v60 = vadd.f32 %v34, 1.0
  %v61 = vlog2.pop %v60
  %v62 = vmul.f32 %v61, 0.6931472
  %v63 = vmul.f32 -0.5, %v34
  %v64 = vadd.f32 %v63, 1.0
  %v65 = vmul.f32 %v64, %v34
  %v66 = vand.u32 2147483647, %v34
  %vm67 = vcmp.lt.f32.partialorder %v66, 0.0004427343
  %v68 = vsel %vm67, %v65, %v62
  %v69 = vadd.f32 %v49, %v59
  %v70 = vadd.f32 %v50, %v68
  %v71 = vld [vmem:[%s2] sm:$0xff]
  %v72 = vadd.f32 %v69, %v70
  %v73 = vadd.f32 %v71, %v72
  %74 = vst [vmem:[%s2] sm:$0xff] %v73
  %s75 = scalar_lea.vmem %s2, 8
  %v76 = vld [vmem:[%s75] sm:$0xff]
  %v77 = vsel %vm25, %v43, 0.0
  %v78 = vsel %vm26, %v44, 0.0
  %v79 = vadd.f32 %v77, %v78
  %v80 = vadd.f32 %v76, %v79
  %81 = vst [vmem:[%s75] sm:$0xff] %v80
  %s82 = scalar_lea.vmem %s2, 16
  %v83 = vld [vmem:[%s82] sm:$0xff]
  %v84 = vmul.f32 %v43, %v43
  %v85 = vmul.f32 %v44, %v44
  %v86 = vadd.f32 %v84, %v85
  %v87 = vadd.f32 %v83, %v86
  %88 = vst [vmem:[%s82] sm:$0xff] %v87
  %s89 = scalar_lea.vmem %s2, 24
  %v90 = vld [vmem:[%s89] sm:$0xff]
  %v91 = vsel %vm25, 1.0, 0.0
  %v92 = vsel %vm26, 1.0, 0.0
  %v93 = vadd.f32 %v91, %v92
  %v94 = vadd.f32 %v90, %v93
  %95 = vst [vmem:[%s89] sm:$0xff] %v94
  // Predicated region
  $region14: #{mask_loss.1} parent=0 // pred_check
    _
  $region15: #{mask_loss.1} parent=0 // pred_check_branch
    %97 = sbr.rel (0) target = $region17
  $region16: #{mask_loss.1} parent=0 // pred_region
    _
  $region17: #{mask_loss.1} parent=0 // pred_fallthru
    _
  // Predicated region
  $region18: #{mask_loss.1} parent=0 // pred_check
    _
  $region19: #{mask_loss.1} parent=0 // pred_check_branch
    %99 = sbr.rel (0) target = $region21
  $region20: #{mask_loss.1} parent=0 // pred_region
    _
  $region21: #{mask_loss.1} parent=0 // pred_fallthru
    _

</llo_original>
